<compile_context>
chip_gen: v7x
topology: tpu7x:2x2x1
jax: 0.10.0
libtpu: 0.0.40
codegen_flags: <defaults>
</compile_context>

<pallas_src>
import jax
import jax.numpy as jnp
from jax import lax
from jax.experimental import pallas as pl
from jax.experimental.pallas import tpu as pltpu

_LANE = 128          # batch lanes per row
_SUB_CHUNK = 16      # rows per inner chunk (2 f32 vregs per channel plane)
_MAX_TILE_ROWS = 128 # max rows per grid step (16K batch elems / step)
_EPS2 = 1e-5         # theta^2 small-angle threshold (f32-safe)


def _round_up(x, m):
    return ((x + m - 1) // m) * m


def _pose_rot_kernel(x_ref, rot_ref):
    """x_ref: (12, TR, 128) packed [w (3 planes); R row-major (9 planes)].
    rot_ref: (9, TR, 128); plane k = row-major entry k of exp(skew(w)) @ R.
    Batch element = row*128 + lane (dense on sublanes AND lanes)."""
    n_chunks = x_ref.shape[1] // _SUB_CHUNK

    def chunk(c, carry):
        r0 = pl.multiple_of(c * _SUB_CHUNK, _SUB_CHUNK)
        rows = pl.ds(r0, _SUB_CHUNK)

        w0 = x_ref[0, rows, :]
        w1 = x_ref[1, rows, :]
        w2 = x_ref[2, rows, :]

        theta2 = w0 * w0 + w1 * w1 + w2 * w2
        small = theta2 < _EPS2
        safe_t2 = jnp.where(small, 1.0, theta2)
        theta = jnp.sqrt(safe_t2)
        inv_t2 = pl.reciprocal(safe_t2)           # one shared reciprocal (exact)
        sin_t = jnp.sin(theta)
        sin_h = jnp.sin(0.5 * theta)
        # a = sin(t)/t ; b = (1-cos t)/t^2 = 2*sin^2(t/2)/t^2 (cancellation-free)
        a = jnp.where(small, 1.0 - theta2 * (1.0 / 6.0), sin_t * theta * inv_t2)
        b = jnp.where(small, 0.5 - theta2 * (1.0 / 24.0),
                      2.0 * sin_h * sin_h * inv_t2)

        # (exp(K) @ R)[:, j] = v + a*(w x v) + b*(w x (w x v)),  v = R[:, j]
        for j in range(3):
            v0 = x_ref[3 + j, rows, :]
            v1 = x_ref[6 + j, rows, :]
            v2 = x_ref[9 + j, rows, :]
            c0 = w1 * v2 - w2 * v1
            c1 = w2 * v0 - w0 * v2
            c2 = w0 * v1 - w1 * v0
            cc0 = w1 * c2 - w2 * c1
            cc1 = w2 * c0 - w0 * c2
            cc2 = w0 * c1 - w1 * c0
            rot_ref[0 + j, rows, :] = v0 + a * c0 + b * cc0
            rot_ref[3 + j, rows, :] = v1 + a * c1 + b * cc1
            rot_ref[6 + j, rows, :] = v2 + a * c2 + b * cc2
        return carry

    lax.fori_loop(0, n_chunks, chunk, 0, unroll=True)


def pose_forward(idx, perturbations_w, rotations, shifts=None, *,
                 use_pallas=None):
    """Returns (rots (B,3,3), shifts (B,S)) — same as PoseModel.forward(idx).
    If shifts is None, returns only rots (matching the PyTorch module)."""
    B = idx.shape[0]
    n_data = rotations.shape[0]
    if use_pallas is None:
        # Below a few thousand elements the fused-XLA path beats kernel launch.
        use_pallas = B >= 4096

    shifts_out = None if shifts is None else shifts[idx]

    if not use_pallas:
        rots = jnp.matmul(_so3exp_ref(perturbations_w[idx].astype(jnp.float32)),
                          rotations[idx].astype(jnp.float32))
        return (rots, shifts_out) if shifts is not None else rots

    # Tiny (n_data, 12) parameter table: [w | R row-major].
    table = jnp.concatenate(
        [perturbations_w.astype(jnp.float32),
         rotations.reshape(n_data, 9).astype(jnp.float32)], axis=1)

    # Batch layout: R rows of 128 lanes.
    R = -(-B // _LANE)
    if R <= _SUB_CHUNK:
        tr = _SUB_CHUNK
    else:
        # Aim for >=2 grid steps (megacore) and cap the tile at 128 rows.
        tr = min(_MAX_TILE_ROWS, _round_up(-(-R // 2), _SUB_CHUNK))
    r_pad = _round_up(R, tr)
    b_pad = r_pad * _LANE

    # Pad/clamp the tiny index vector instead of padding the packed data.
    idx_pad = jnp.clip(jnp.pad(idx.astype(jnp.int32), (0, b_pad - B)),
                       0, n_data - 1)
    # Single fused XLA gather+layout op -> (12, r_pad, 128).
    packed = table[idx_pad].reshape(r_pad, _LANE, 12).transpose(2, 0, 1)

    rot_soa = pl.pallas_call(
        _pose_rot_kernel,
        out_shape=jax.ShapeDtypeStruct((9, r_pad, _LANE), jnp.float32),
        grid=(r_pad // tr,),
        in_specs=[pl.BlockSpec((12, tr, _LANE), lambda i: (0, i, 0))],
        out_specs=pl.BlockSpec((9, tr, _LANE), lambda i: (0, i, 0)),
        compiler_params=pltpu.CompilerParams(
            dimension_semantics=("parallel",)),
    )(packed)

    # TODO(synk): if the consumer accepts a structure-of-arrays (9, B) result,
    # return rot_soa.reshape(9, -1)[:, :B] directly and skip this transpose.
    rots = rot_soa.reshape(9, b_pad)[:, :B].T.reshape(B, 3, 3)
    if shifts is not None:
        return rots, shifts_out
    return rots


# ----------------------- pure-JAX reference / init helpers ------------------
def _so3exp_ref(w):
    """Rodrigues: exp(skew(w)) for w of shape (N, 3)."""
    theta2 = jnp.sum(w * w, axis=-1)
    small = theta2 < _EPS2
    safe_t2 = jnp.where(small, 1.0, theta2)
    theta = jnp.sqrt(safe_t2)
    a = jnp.where(small, 1.0 - theta2 / 6.0, jnp.sin(theta) / theta)
    b = jnp.where(small, 0.5 - theta2 / 24.0, (1.0 - jnp.cos(theta)) / safe_t2)
    z = jnp.zeros_like(w[:, 0])
    K = jnp.stack([
        jnp.stack([z, -w[:, 2], w[:, 1]], axis=-1),
        jnp.stack([w[:, 2], z, -w[:, 0]], axis=-1),
        jnp.stack([-w[:, 1], w[:, 0], z], axis=-1)], axis=-2)
    I = jnp.eye(3, dtype=w.dtype)[None]
    return I + a[:, None, None] * K + b[:, None, None] * jnp.matmul(K, K)


def _ref_forward(idx, perturbations_w, rotations, shifts):
    Rp = _so3exp_ref(perturbations_w[idx])
    return jnp.matmul(Rp, rotations[idx]), shifts[idx]


# ---------------------------------- main -------------------------------------
if __name__ == "__main__":
    key = jax.random.PRNGKey(0)
    k_rot, k_pert, k_shift, k_idx, k_idx2 = jax.random.split(key, 5)

    n_data = 16   # number of poses stored in the model
    B = 8         # batch of indices per forward call
    S = 2         # shift dimensionality

    # Synthetic parameters (shapes follow PoseModel.__init__):
    #   rotations: valid SO(3) matrices; perturbations_w: half zero (module
    #   inits zeros) and half small random so both Rodrigues branches run.
    rotations = _so3exp_ref(jax.random.normal(k_rot, (n_data, 3), jnp.float32))
    pert = 0.1 * jax.random.normal(k_pert, (n_data, 3), jnp.float32)
    perturbations_w = pert.at[: n_data // 2].set(0.0)
    shifts = jax.random.normal(k_shift, (n_data, S), jnp.float32)

    fwd = jax.jit(lambda i: pose_forward(i, perturbations_w, rotations, shifts,
                                         use_pallas=True))

    # Small-batch check (single grid step).
    idx = jax.random.randint(k_idx, (B,), 0, n_data, dtype=jnp.int32)
    rots_out, shifts_out = fwd(idx)
    jax.block_until_ready((rots_out, shifts_out))
    rots_ref, shifts_ref = _ref_forward(idx, perturbations_w, rotations, shifts)
    assert rots_out.shape == (B, 3, 3) and shifts_out.shape == (B, S)
    assert jnp.allclose(rots_out, rots_ref, atol=1e-5, rtol=1e-5)
    assert jnp.allclose(shifts_out, shifts_ref, atol=1e-6, rtol=1e-6)

    # Multi-tile check (grid of 2 steps, exercises padding + megacore split).
    B2 = 2176
    idx2 = jax.random.randint(k_idx2, (B2,), 0, n_data, dtype=jnp.int32)
    rots2, shifts2 = fwd(idx2)
    jax.block_until_ready((rots2, shifts2))
    rots2_ref, shifts2_ref = _ref_forward(idx2, perturbations_w, rotations,
                                          shifts)
    assert jnp.allclose(rots2, rots2_ref, atol=1e-5, rtol=1e-5)
    assert jnp.allclose(shifts2, shifts2_ref, atol=1e-6, rtol=1e-6)

    print("KERNEL_OK")
</pallas_src>

<mosaic_0001>
module attributes {stable_mosaic.version = 11 : i64} {
  func.func @_pose_rot_kernel(%arg0: i32, %arg1: memref<12x16x128xf32, #tpu.memory_space<vmem>>, %arg2: memref<9x16x128xf32, #tpu.memory_space<vmem>>) attributes {dimension_semantics = [#tpu.dimension_semantics<parallel>], iteration_bounds = array<i64: 1>, scalar_prefetch = 0 : i64, scratch_operands = 0 : i64, tpu.core_type = #tpu.core_type<tc>, window_params = [{transform_indices = @transform_0, window_bounds = array<i64: 12, 16, 128>}, {transform_indices = @transform_1, window_bounds = array<i64: 9, 16, 128>}]} {
    %c0_i32 = arith.constant 0 : i32
    %c16_i32 = arith.constant 16 : i32
    %0 = arith.muli %c0_i32, %c16_i32 : i32
    %1 = tpu.assume_multiple %0, 16 : i32
    %c0 = arith.constant 0 : index
    %2 = arith.index_cast %1 : i32 to index
    %c0_0 = arith.constant 0 : index
    %3 = vector.load %arg1[%c0, %2, %c0_0] : memref<12x16x128xf32, #tpu.memory_space<vmem>>, vector<1x16x128xf32>
    %4 = vector.shape_cast %3 : vector<1x16x128xf32> to vector<16x128xf32>
    %c1 = arith.constant 1 : index
    %5 = arith.index_cast %1 : i32 to index
    %c0_1 = arith.constant 0 : index
    %6 = vector.load %arg1[%c1, %5, %c0_1] : memref<12x16x128xf32, #tpu.memory_space<vmem>>, vector<1x16x128xf32>
    %7 = vector.shape_cast %6 : vector<1x16x128xf32> to vector<16x128xf32>
    %c2 = arith.constant 2 : index
    %8 = arith.index_cast %1 : i32 to index
    %c0_2 = arith.constant 0 : index
    %9 = vector.load %arg1[%c2, %8, %c0_2] : memref<12x16x128xf32, #tpu.memory_space<vmem>>, vector<1x16x128xf32>
    %10 = vector.shape_cast %9 : vector<1x16x128xf32> to vector<16x128xf32>
    %11 = arith.mulf %4, %4 : vector<16x128xf32>
    %12 = arith.mulf %7, %7 : vector<16x128xf32>
    %13 = arith.addf %11, %12 : vector<16x128xf32>
    %14 = arith.mulf %10, %10 : vector<16x128xf32>
    %15 = arith.addf %13, %14 : vector<16x128xf32>
    %cst = arith.constant 9.99999974E-6 : f32
    %16 = vector.broadcast %cst : f32 to vector<16x128xf32>
    %17 = arith.cmpf olt, %15, %16 : vector<16x128xf32>
    %cst_3 = arith.constant 1.000000e+00 : f32
    %18 = vector.broadcast %cst_3 : f32 to vector<16x128xf32>
    %19 = arith.select %17, %18, %15 : vector<16x128xi1>, vector<16x128xf32>
    %20 = math.sqrt %19 : vector<16x128xf32>
    %21 = tpu.reciprocal %19 : vector<16x128xf32> -> vector<16x128xf32>
    %22 = math.sin %20 : vector<16x128xf32>
    %cst_4 = arith.constant 5.000000e-01 : f32
    %23 = vector.broadcast %cst_4 : f32 to vector<16x128xf32>
    %24 = arith.mulf %23, %20 : vector<16x128xf32>
    %25 = math.sin %24 : vector<16x128xf32>
    %cst_5 = arith.constant 0.166666672 : f32
    %26 = vector.broadcast %cst_5 : f32 to vector<16x128xf32>
    %27 = arith.mulf %15, %26 : vector<16x128xf32>
    %cst_6 = arith.constant 1.000000e+00 : f32
    %28 = vector.broadcast %cst_6 : f32 to vector<16x128xf32>
    %29 = arith.subf %28, %27 : vector<16x128xf32>
    %30 = arith.mulf %22, %20 : vector<16x128xf32>
    %31 = arith.mulf %30, %21 : vector<16x128xf32>
    %32 = arith.select %17, %29, %31 : vector<16x128xi1>, vector<16x128xf32>
    %cst_7 = arith.constant 0.0416666679 : f32
    %33 = vector.broadcast %cst_7 : f32 to vector<16x128xf32>
    %34 = arith.mulf %15, %33 : vector<16x128xf32>
    %cst_8 = arith.constant 5.000000e-01 : f32
    %35 = vector.broadcast %cst_8 : f32 to vector<16x128xf32>
    %36 = arith.subf %35, %34 : vector<16x128xf32>
    %cst_9 = arith.constant 2.000000e+00 : f32
    %37 = vector.broadcast %cst_9 : f32 to vector<16x128xf32>
    %38 = arith.mulf %37, %25 : vector<16x128xf32>
    %39 = arith.mulf %38, %25 : vector<16x128xf32>
    %40 = arith.mulf %39, %21 : vector<16x128xf32>
    %41 = arith.select %17, %36, %40 : vector<16x128xi1>, vector<16x128xf32>
    %c3 = arith.constant 3 : index
    %42 = arith.index_cast %1 : i32 to index
    %c0_10 = arith.constant 0 : index
    %43 = vector.load %arg1[%c3, %42, %c0_10] : memref<12x16x128xf32, #tpu.memory_space<vmem>>, vector<1x16x128xf32>
    %44 = vector.shape_cast %43 : vector<1x16x128xf32> to vector<16x128xf32>
    %c6 = arith.constant 6 : index
    %45 = arith.index_cast %1 : i32 to index
    %c0_11 = arith.constant 0 : index
    %46 = vector.load %arg1[%c6, %45, %c0_11] : memref<12x16x128xf32, #tpu.memory_space<vmem>>, vector<1x16x128xf32>
    %47 = vector.shape_cast %46 : vector<1x16x128xf32> to vector<16x128xf32>
    %c9 = arith.constant 9 : index
    %48 = arith.index_cast %1 : i32 to index
    %c0_12 = arith.constant 0 : index
    %49 = vector.load %arg1[%c9, %48, %c0_12] : memref<12x16x128xf32, #tpu.memory_space<vmem>>, vector<1x16x128xf32>
    %50 = vector.shape_cast %49 : vector<1x16x128xf32> to vector<16x128xf32>
    %51 = arith.mulf %7, %50 : vector<16x128xf32>
    %52 = arith.mulf %10, %47 : vector<16x128xf32>
    %53 = arith.subf %51, %52 : vector<16x128xf32>
    %54 = arith.mulf %10, %44 : vector<16x128xf32>
    %55 = arith.mulf %4, %50 : vector<16x128xf32>
    %56 = arith.subf %54, %55 : vector<16x128xf32>
    %57 = arith.mulf %4, %47 : vector<16x128xf32>
    %58 = arith.mulf %7, %44 : vector<16x128xf32>
    %59 = arith.subf %57, %58 : vector<16x128xf32>
    %60 = arith.mulf %7, %59 : vector<16x128xf32>
    %61 = arith.mulf %10, %56 : vector<16x128xf32>
    %62 = arith.subf %60, %61 : vector<16x128xf32>
    %63 = arith.mulf %10, %53 : vector<16x128xf32>
    %64 = arith.mulf %4, %59 : vector<16x128xf32>
    %65 = arith.subf %63, %64 : vector<16x128xf32>
    %66 = arith.mulf %4, %56 : vector<16x128xf32>
    %67 = arith.mulf %7, %53 : vector<16x128xf32>
    %68 = arith.subf %66, %67 : vector<16x128xf32>
    %69 = arith.mulf %32, %53 : vector<16x128xf32>
    %70 = arith.addf %44, %69 : vector<16x128xf32>
    %71 = arith.mulf %41, %62 : vector<16x128xf32>
    %72 = arith.addf %70, %71 : vector<16x128xf32>
    %c0_13 = arith.constant 0 : index
    %73 = arith.index_cast %1 : i32 to index
    %c0_14 = arith.constant 0 : index
    %74 = vector.load %arg2[%c0_13, %73, %c0_14] : memref<9x16x128xf32, #tpu.memory_space<vmem>>, vector<1x16x128xf32>
    %75 = vector.shape_cast %74 : vector<1x16x128xf32> to vector<16x128xf32>
    %76 = vector.shape_cast %72 : vector<16x128xf32> to vector<1x16x128xf32>
    tpu.vector_store %arg2[%c0_13, %73, %c0_14], %76 {strides = array<i32>} : memref<9x16x128xf32, #tpu.memory_space<vmem>>, vector<1x16x128xf32>,
    %77 = arith.mulf %32, %56 : vector<16x128xf32>
    %78 = arith.addf %47, %77 : vector<16x128xf32>
    %79 = arith.mulf %41, %65 : vector<16x128xf32>
    %80 = arith.addf %78, %79 : vector<16x128xf32>
    %c3_15 = arith.constant 3 : index
    %81 = arith.index_cast %1 : i32 to index
    %c0_16 = arith.constant 0 : index
    %82 = vector.load %arg2[%c3_15, %81, %c0_16] : memref<9x16x128xf32, #tpu.memory_space<vmem>>, vector<1x16x128xf32>
    %83 = vector.shape_cast %82 : vector<1x16x128xf32> to vector<16x128xf32>
    %84 = vector.shape_cast %80 : vector<16x128xf32> to vector<1x16x128xf32>
    tpu.vector_store %arg2[%c3_15, %81, %c0_16], %84 {strides = array<i32>} : memref<9x16x128xf32, #tpu.memory_space<vmem>>, vector<1x16x128xf32>,
    %85 = arith.mulf %32, %59 : vector<16x128xf32>
    %86 = arith.addf %50, %85 : vector<16x128xf32>
    %87 = arith.mulf %41, %68 : vector<16x128xf32>
    %88 = arith.addf %86, %87 : vector<16x128xf32>
    %c6_17 = arith.constant 6 : index
    %89 = arith.index_cast %1 : i32 to index
    %c0_18 = arith.constant 0 : index
    %90 = vector.load %arg2[%c6_17, %89, %c0_18] : memref<9x16x128xf32, #tpu.memory_space<vmem>>, vector<1x16x128xf32>
    %91 = vector.shape_cast %90 : vector<1x16x128xf32> to vector<16x128xf32>
    %92 = vector.shape_cast %88 : vector<16x128xf32> to vector<1x16x128xf32>
    tpu.vector_store %arg2[%c6_17, %89, %c0_18], %92 {strides = array<i32>} : memref<9x16x128xf32, #tpu.memory_space<vmem>>, vector<1x16x128xf32>,
    %c4 = arith.constant 4 : index
    %93 = arith.index_cast %1 : i32 to index
    %c0_19 = arith.constant 0 : index
    %94 = vector.load %arg1[%c4, %93, %c0_19] : memref<12x16x128xf32, #tpu.memory_space<vmem>>, vector<1x16x128xf32>
    %95 = vector.shape_cast %94 : vector<1x16x128xf32> to vector<16x128xf32>
    %c7 = arith.constant 7 : index
    %96 = arith.index_cast %1 : i32 to index
    %c0_20 = arith.constant 0 : index
    %97 = vector.load %arg1[%c7, %96, %c0_20] : memref<12x16x128xf32, #tpu.memory_space<vmem>>, vector<1x16x128xf32>
    %98 = vector.shape_cast %97 : vector<1x16x128xf32> to vector<16x128xf32>
    %c10 = arith.constant 10 : index
    %99 = arith.index_cast %1 : i32 to index
    %c0_21 = arith.constant 0 : index
    %100 = vector.load %arg1[%c10, %99, %c0_21] : memref<12x16x128xf32, #tpu.memory_space<vmem>>, vector<1x16x128xf32>
    %101 = vector.shape_cast %100 : vector<1x16x128xf32> to vector<16x128xf32>
    %102 = arith.mulf %7, %101 : vector<16x128xf32>
    %103 = arith.mulf %10, %98 : vector<16x128xf32>
    %104 = arith.subf %102, %103 : vector<16x128xf32>
    %105 = arith.mulf %10, %95 : vector<16x128xf32>
    %106 = arith.mulf %4, %101 : vector<16x128xf32>
    %107 = arith.subf %105, %106 : vector<16x128xf32>
    %108 = arith.mulf %4, %98 : vector<16x128xf32>
    %109 = arith.mulf %7, %95 : vector<16x128xf32>
    %110 = arith.subf %108, %109 : vector<16x128xf32>
    %111 = arith.mulf %7, %110 : vector<16x128xf32>
    %112 = arith.mulf %10, %107 : vector<16x128xf32>
    %113 = arith.subf %111, %112 : vector<16x128xf32>
    %114 = arith.mulf %10, %104 : vector<16x128xf32>
    %115 = arith.mulf %4, %110 : vector<16x128xf32>
    %116 = arith.subf %114, %115 : vector<16x128xf32>
    %117 = arith.mulf %4, %107 : vector<16x128xf32>
    %118 = arith.mulf %7, %104 : vector<16x128xf32>
    %119 = arith.subf %117, %118 : vector<16x128xf32>
    %120 = arith.mulf %32, %104 : vector<16x128xf32>
    %121 = arith.addf %95, %120 : vector<16x128xf32>
    %122 = arith.mulf %41, %113 : vector<16x128xf32>
    %123 = arith.addf %121, %122 : vector<16x128xf32>
    %c1_22 = arith.constant 1 : index
    %124 = arith.index_cast %1 : i32 to index
    %c0_23 = arith.constant 0 : index
    %125 = vector.load %arg2[%c1_22, %124, %c0_23] : memref<9x16x128xf32, #tpu.memory_space<vmem>>, vector<1x16x128xf32>
    %126 = vector.shape_cast %125 : vector<1x16x128xf32> to vector<16x128xf32>
    %127 = vector.shape_cast %123 : vector<16x128xf32> to vector<1x16x128xf32>
    tpu.vector_store %arg2[%c1_22, %124, %c0_23], %127 {strides = array<i32>} : memref<9x16x128xf32, #tpu.memory_space<vmem>>, vector<1x16x128xf32>,
    %128 = arith.mulf %32, %107 : vector<16x128xf32>
    %129 = arith.addf %98, %128 : vector<16x128xf32>
    %130 = arith.mulf %41, %116 : vector<16x128xf32>
    %131 = arith.addf %129, %130 : vector<16x128xf32>
    %c4_24 = arith.constant 4 : index
    %132 = arith.index_cast %1 : i32 to index
    %c0_25 = arith.constant 0 : index
    %133 = vector.load %arg2[%c4_24, %132, %c0_25] : memref<9x16x128xf32, #tpu.memory_space<vmem>>, vector<1x16x128xf32>
    %134 = vector.shape_cast %133 : vector<1x16x128xf32> to vector<16x128xf32>
    %135 = vector.shape_cast %131 : vector<16x128xf32> to vector<1x16x128xf32>
    tpu.vector_store %arg2[%c4_24, %132, %c0_25], %135 {strides = array<i32>} : memref<9x16x128xf32, #tpu.memory_space<vmem>>, vector<1x16x128xf32>,
    %136 = arith.mulf %32, %110 : vector<16x128xf32>
    %137 = arith.addf %101, %136 : vector<16x128xf32>
    %138 = arith.mulf %41, %119 : vector<16x128xf32>
    %139 = arith.addf %137, %138 : vector<16x128xf32>
    %c7_26 = arith.constant 7 : index
    %140 = arith.index_cast %1 : i32 to index
    %c0_27 = arith.constant 0 : index
    %141 = vector.load %arg2[%c7_26, %140, %c0_27] : memref<9x16x128xf32, #tpu.memory_space<vmem>>, vector<1x16x128xf32>
    %142 = vector.shape_cast %141 : vector<1x16x128xf32> to vector<16x128xf32>
    %143 = vector.shape_cast %139 : vector<16x128xf32> to vector<1x16x128xf32>
    tpu.vector_store %arg2[%c7_26, %140, %c0_27], %143 {strides = array<i32>} : memref<9x16x128xf32, #tpu.memory_space<vmem>>, vector<1x16x128xf32>,
    %c5 = arith.constant 5 : index
    %144 = arith.index_cast %1 : i32 to index
    %c0_28 = arith.constant 0 : index
    %145 = vector.load %arg1[%c5, %144, %c0_28] : memref<12x16x128xf32, #tpu.memory_space<vmem>>, vector<1x16x128xf32>
    %146 = vector.shape_cast %145 : vector<1x16x128xf32> to vector<16x128xf32>
    %c8 = arith.constant 8 : index
    %147 = arith.index_cast %1 : i32 to index
    %c0_29 = arith.constant 0 : index
    %148 = vector.load %arg1[%c8, %147, %c0_29] : memref<12x16x128xf32, #tpu.memory_space<vmem>>, vector<1x16x128xf32>
    %149 = vector.shape_cast %148 : vector<1x16x128xf32> to vector<16x128xf32>
    %c11 = arith.constant 11 : index
    %150 = arith.index_cast %1 : i32 to index
    %c0_30 = arith.constant 0 : index
    %151 = vector.load %arg1[%c11, %150, %c0_30] : memref<12x16x128xf32, #tpu.memory_space<vmem>>, vector<1x16x128xf32>
    %152 = vector.shape_cast %151 : vector<1x16x128xf32> to vector<16x128xf32>
    %153 = arith.mulf %7, %152 : vector<16x128xf32>
    %154 = arith.mulf %10, %149 : vector<16x128xf32>
    %155 = arith.subf %153, %154 : vector<16x128xf32>
    %156 = arith.mulf %10, %146 : vector<16x128xf32>
    %157 = arith.mulf %4, %152 : vector<16x128xf32>
    %158 = arith.subf %156, %157 : vector<16x128xf32>
    %159 = arith.mulf %4, %149 : vector<16x128xf32>
    %160 = arith.mulf %7, %146 : vector<16x128xf32>
    %161 = arith.subf %159, %160 : vector<16x128xf32>
    %162 = arith.mulf %7, %161 : vector<16x128xf32>
    %163 = arith.mulf %10, %158 : vector<16x128xf32>
    %164 = arith.subf %162, %163 : vector<16x128xf32>
    %165 = arith.mulf %10, %155 : vector<16x128xf32>
    %166 = arith.mulf %4, %161 : vector<16x128xf32>
    %167 = arith.subf %165, %166 : vector<16x128xf32>
    %168 = arith.mulf %4, %158 : vector<16x128xf32>
    %169 = arith.mulf %7, %155 : vector<16x128xf32>
    %170 = arith.subf %168, %169 : vector<16x128xf32>
    %171 = arith.mulf %32, %155 : vector<16x128xf32>
    %172 = arith.addf %146, %171 : vector<16x128xf32>
    %173 = arith.mulf %41, %164 : vector<16x128xf32>
    %174 = arith.addf %172, %173 : vector<16x128xf32>
    %c2_31 = arith.constant 2 : index
    %175 = arith.index_cast %1 : i32 to index
    %c0_32 = arith.constant 0 : index
    %176 = vector.load %arg2[%c2_31, %175, %c0_32] : memref<9x16x128xf32, #tpu.memory_space<vmem>>, vector<1x16x128xf32>
    %177 = vector.shape_cast %176 : vector<1x16x128xf32> to vector<16x128xf32>
    %178 = vector.shape_cast %174 : vector<16x128xf32> to vector<1x16x128xf32>
    tpu.vector_store %arg2[%c2_31, %175, %c0_32], %178 {strides = array<i32>} : memref<9x16x128xf32, #tpu.memory_space<vmem>>, vector<1x16x128xf32>,
    %179 = arith.mulf %32, %158 : vector<16x128xf32>
    %180 = arith.addf %149, %179 : vector<16x128xf32>
    %181 = arith.mulf %41, %167 : vector<16x128xf32>
    %182 = arith.addf %180, %181 : vector<16x128xf32>
    %c5_33 = arith.constant 5 : index
    %183 = arith.index_cast %1 : i32 to index
    %c0_34 = arith.constant 0 : index
    %184 = vector.load %arg2[%c5_33, %183, %c0_34] : memref<9x16x128xf32, #tpu.memory_space<vmem>>, vector<1x16x128xf32>
    %185 = vector.shape_cast %184 : vector<1x16x128xf32> to vector<16x128xf32>
    %186 = vector.shape_cast %182 : vector<16x128xf32> to vector<1x16x128xf32>
    tpu.vector_store %arg2[%c5_33, %183, %c0_34], %186 {strides = array<i32>} : memref<9x16x128xf32, #tpu.memory_space<vmem>>, vector<1x16x128xf32>,
    %187 = arith.mulf %32, %161 : vector<16x128xf32>
    %188 = arith.addf %152, %187 : vector<16x128xf32>
    %189 = arith.mulf %41, %170 : vector<16x128xf32>
    %190 = arith.addf %188, %189 : vector<16x128xf32>
    %c8_35 = arith.constant 8 : index
    %191 = arith.index_cast %1 : i32 to index
    %c0_36 = arith.constant 0 : index
    %192 = vector.load %arg2[%c8_35, %191, %c0_36] : memref<9x16x128xf32, #tpu.memory_space<vmem>>, vector<1x16x128xf32>
    %193 = vector.shape_cast %192 : vector<1x16x128xf32> to vector<16x128xf32>
    %194 = vector.shape_cast %190 : vector<16x128xf32> to vector<1x16x128xf32>
    tpu.vector_store %arg2[%c8_35, %191, %c0_36], %194 {strides = array<i32>} : memref<9x16x128xf32, #tpu.memory_space<vmem>>, vector<1x16x128xf32>,
    %c1_i32 = arith.constant 1 : i32
    return
  }
  func.func @transform_0(%arg0: i32) -> (i32, i32, i32) {
    %c0_i32 = arith.constant 0 : i32
    %c0_i32_0 = arith.constant 0 : i32
    %c0_i32_1 = arith.constant 0 : i32
    return %c0_i32, %arg0, %c0_i32_0 : i32, i32, i32
  }
  func.func @transform_1(%arg0: i32) -> (i32, i32, i32) {
    %c0_i32 = arith.constant 0 : i32
    %c0_i32_0 = arith.constant 0 : i32
    %c0_i32_1 = arith.constant 0 : i32
    return %c0_i32, %arg0, %c0_i32_0 : i32, i32, i32
  }
}

</mosaic_0001>

<llo_original>
// kernel: _lambda_.1
$region0: #{_lambda_.1}
  #allocation0 [shape = 'u32[]', space=smem, size = 0x4, offset = 0x4, fixed_abs, tag = 'smem constant byte address 0x4 - core index']
  #allocation1 [shape = 'u32[144,128]{1,0:T(1,128)}', space=vmem, size = 0x12000, scoped, tag = 'internal scratch']
  %s0 = inlined_call_operand.vmem [shape: f32[12,16,128], index: 0, kind: input, shape index: {}]
  %s1 = inlined_call_operand.vmem [shape: f32[9,16,128], index: 1, kind: output, shape index: {}]
  %s2 = sld [smem:[#allocation0]]
  $region14: #{_lambda_.1} parent=0
    _
  %s4 = ssub.s32 1, %s2
  %s5 = scalar_select 0, %s4, %s2
  // Predicated region
  $region2: #{_lambda_.1} parent=0 // pred_check
    _
  $region3: #{_lambda_.1} parent=0 // pred_check_branch
    %7 = sbr.rel (0) target = $region5
  $region4: #{_lambda_.1} parent=0 // pred_region
    _
  $region5: #{_lambda_.1} parent=0 // pred_fallthru
    _
  %v8 = vld [vmem:[%s0] sm:$0xff]
  %v9 = vld [vmem:[%s0 + $0x8] sm:$0xff]
  %s10 = sadd.s32 0, 16
  %s11 = scalar_lea.vmem %s0, %s10
  %v12 = vld [vmem:[%s11] sm:$0xff]
  %v13 = vld [vmem:[%s11 + $0x8] sm:$0xff]
  %s14 = sadd.s32 0, 32
  %s15 = scalar_lea.vmem %s0, %s14
  %v16 = vld [vmem:[%s15] sm:$0xff]
  %v17 = vld [vmem:[%s15 + $0x8] sm:$0xff]
  %v18 = vmul.f32 %v8, %v8
  %v19 = vmul.f32 %v9, %v9
  %v20 = vmul.f32 %v12, %v12
  %v21 = vmul.f32 %v13, %v13
  %v22 = vadd.f32 %v18, %v20
  %v23 = vadd.f32 %v19, %v21
  %v24 = vmul.f32 %v16, %v16
  %v25 = vmul.f32 %v17, %v17
  %v26 = vadd.f32 %v22, %v24
  %v27 = vadd.f32 %v23, %v25
  %vm28 = vcmp.lt.f32.partialorder %v26, 1e-05
  %vm29 = vcmp.lt.f32.partialorder %v27, 1e-05
  %v30 = vsel %vm28, 1.0, %v26
  %v31 = vsel %vm29, 1.0, %v27
  %v32 = vrsqrt.pop %v30
  %v33 = vmul.f32 %v30, %v32
  %vm34 = vcmp.eq.f32.partialorder %v30, inf
  %v35 = vsel %vm34, %v30, %v33
  %vm36 = vcmp.eq.f32.partialorder %v30, 0.0
  %v37 = vand.u32 %v30, 2147483648
  %v38 = vsel %vm36, %v37, %v35
  %v39 = vrsqrt.pop %v31
  %v40 = vmul.f32 %v31, %v39
  %vm41 = vcmp.eq.f32.partialorder %v31, inf
  %v42 = vsel %vm41, %v31, %v40
  %vm43 = vcmp.eq.f32.partialorder %v31, 0.0
  %v44 = vand.u32 %v31, 2147483648
  %v45 = vsel %vm43, %v44, %v42
  %v46 = vrcp.pop %v30
  %v47 = vrcp.pop %v31
  %v48 = vand.u32 2147483647, %v38
  %vm49 = vcmp.le.f32.partialorder %v48, 0.7853982
  %vm50 = vcmp.lt.s32.totalorder %v38, 0
  %v51 = vand.u32 %v38, 2139095040
  %v52 = vshrl.u32 %v51, 23
  %v53 = vsub.s32 %v52, 127
  %v54 = vand.u32 2147483647, %v38
  %v55 = vand.u32 %v54, 8388607
  %v56 = vor.u32 %v55, 8388608
  %v57 = vsub.s32 0, %v56
  %v58 = vadd.s32 %v53, 1
  %vm59 = vcmp.gt.s32.totalorder %v58, 0
  %v60 = vsel %vm59, %v58, 0
  %v61 = vshrl.u32 %v60, 5
  %v62 = vand.u32 %v60, 31
  %v63 = vsub.s32 32, %v62
  %v64 = vshrl.u32 683565275, %v63
  %v65 = vshll.u32 683565275, %v62
  %v66 = vshrl.u32 2475754826, %v63
  %v67 = vor.u32 %v65, %v66
  %v68 = vshll.u32 2475754826, %v62
  %v69 = vshrl.u32 2131351028, %v63
  %v70 = vor.u32 %v68, %v69
  %v71 = vshll.u32 2131351028, %v62
  %v72 = vshrl.u32 2102212464, %v63
  %v73 = vor.u32 %v71, %v72
  %v74 = vshll.u32 2102212464, %v62
  %v75 = vshrl.u32 920167782, %v63
  %v76 = vor.u32 %v74, %v75
  %v77 = vshll.u32 920167782, %v62
  %v78 = vshrl.u32 1326507024, %v63
  %v79 = vor.u32 %v77, %v78
  %vm80 = vcmp.lt.s32.totalorder %v61, 1
  %vm81 = vcmp.lt.s32.totalorder %v61, 2
  %vm82 = vcmp.lt.s32.totalorder %v61, 3
  %vm83 = vcmp.lt.s32.totalorder %v61, 4
  %v84 = vsel %vm80, %v64, %v67
  %v85 = vsel %vm83, %v73, 2102212464
  %v86 = vsel %vm82, %v70, %v85
  %v87 = vsel %vm81, %v84, %v86
  %v88 = vsel %vm80, %v67, %v70
  %v89 = vsel %vm83, %v76, 920167782
  %v90 = vsel %vm82, %v73, %v89
  %v91 = vsel %vm81, %v88, %v90
  %v92 = vsel %vm80, %v70, %v73
  %v93 = vsel %vm83, %v79, 1326507024
  %v94 = vsel %vm82, %v76, %v93
  %v95 = vsel %vm81, %v92, %v94
  %v96 = vshll.u32 %v56, 8
  %v97 = vmul.u32.u64.compose %v96, %v95
  %v98 = vextract.low.u32 %v97
  %v99 = vextract.high.u32 %v97
  %v100 = vmul.u32.u64.compose %v96, %v91
  %v101 = vextract.low.u32 %v100
  %v102 = vextract.high.u32 %v100
  %v103 = vmul.u32 %v96, %v87
  %v104 = vadd.s32 %v99, %v101
  %vm105 = vc.u32 %v99, %v101
  %v106 = vadd.s32 %v102, 1
  %v107 = vsel %vm105, %v106, %v102
  %v108 = vadd.s32 %v103, %v107
  %v109 = vadd.s32 %v108, 536870912
  %v110 = vshrl.u32 %v109, 30
  %v111 = vshll.u32 %v110, 30
  %v112 = vsub.s32 %v108, %v111
  %vm113 = vcmp.lt.s32.totalorder %v112, 0
  %v114 = vsub.s32 0, %v112
  %v115 = vsel %vm113, %v114, %v112
  %v116 = vclz %v115
  %v117 = vsub.s32 %v116, 2
  %vm118 = vcmp.gt.s32.totalorder 0, %v117
  %v119 = vsel %vm118, 0, %v117
  %v120 = vsub.s32 32, %v119
  %v121 = vshll.u32 %v112, %v119
  %v122 = vshrl.u32 %v104, %v120
  %v123 = vor.u32 %v121, %v122
  %v124 = vsub.s32 4294967266, %v119
  %v125 = vadd.s32 %v124, 127
  %v126 = vshll.u32 %v125, 23
  %v127 = vor.u32 4788187, %v126
  %v128 = vand.u32 2147483647, %v127
  %v130 = vcvt.s32.f32 %v123
  %v131 = vmul.f32 %v130, %v128
  %v132 = vxor.u32 %v131, 2147483648
  %v133 = vsel %vm50, %v132, %v131
  %v134 = vsub.s32 4, %v110
  %v135 = vsel %vm50, %v134, %v110
  %v136 = vsel %vm49, %v38, %v133
  %v137 = vsel %vm49, 0, %v135
  %v138 = vcosq.f32.pop %v136
  %v139 = vsinq.f32.pop %v136
  %vm140 = vweird.f32 %v38
  %v141 = vadd.s32 %v137, 3
  %v142 = vand.u32 %v141, 3
  %vm143 = vcmp.lt.s32.totalorder %v142, 2
  %vm144 = vcmp.eq.s32.totalorder %v142, 0
  %v145 = vxor.u32 %v139, 2147483648
  %v146 = vsel %vm144, %v138, %v145
  %vm147 = vcmp.eq.s32.totalorder %v142, 2
  %v148 = vxor.u32 %v138, 2147483648
  %v149 = vsel %vm147, %v148, %v139
  %v150 = vsel %vm143, %v146, %v149
  %v151 = vsel %vm140, nan, %v150
  %v152 = vand.u32 2147483647, %v45
  %vm153 = vcmp.le.f32.partialorder %v152, 0.7853982
  %vm154 = vcmp.lt.s32.totalorder %v45, 0
  %v155 = vand.u32 %v45, 2139095040
  %v156 = vshrl.u32 %v155, 23
  %v157 = vsub.s32 %v156, 127
  %v158 = vand.u32 2147483647, %v45
  %v159 = vand.u32 %v158, 8388607
  %v160 = vor.u32 %v159, 8388608
  %v161 = vsub.s32 0, %v160
  %v162 = vadd.s32 %v157, 1
  %vm163 = vcmp.gt.s32.totalorder %v162, 0
  %v164 = vsel %vm163, %v162, 0
  %v165 = vshrl.u32 %v164, 5
  %v166 = vand.u32 %v164, 31
  %v167 = vsub.s32 32, %v166
  %v168 = vshrl.u32 683565275, %v167
  %v169 = vshll.u32 683565275, %v166
  %v170 = vshrl.u32 2475754826, %v167
  %v171 = vor.u32 %v169, %v170
  %v172 = vshll.u32 2475754826, %v166
  %v173 = vshrl.u32 2131351028, %v167
  %v174 = vor.u32 %v172, %v173
  %v175 = vshll.u32 2131351028, %v166
  %v176 = vshrl.u32 2102212464, %v167
  %v177 = vor.u32 %v175, %v176
  %v178 = vshll.u32 2102212464, %v166
  %v179 = vshrl.u32 920167782, %v167
  %v180 = vor.u32 %v178, %v179
  %v181 = vshll.u32 920167782, %v166
  %v182 = vshrl.u32 1326507024, %v167
  %v183 = vor.u32 %v181, %v182
  %vm184 = vcmp.lt.s32.totalorder %v165, 1
  %vm185 = vcmp.lt.s32.totalorder %v165, 2
  %vm186 = vcmp.lt.s32.totalorder %v165, 3
  %vm187 = vcmp.lt.s32.totalorder %v165, 4
  %v188 = vsel %vm184, %v168, %v171
  %v189 = vsel %vm187, %v177, 2102212464
  %v190 = vsel %vm186, %v174, %v189
  %v191 = vsel %vm185, %v188, %v190
  %v192 = vsel %vm184, %v171, %v174
  %v193 = vsel %vm187, %v180, 920167782
  %v194 = vsel %vm186, %v177, %v193
  %v195 = vsel %vm185, %v192, %v194
  %v196 = vsel %vm184, %v174, %v177
  %v197 = vsel %vm187, %v183, 1326507024
  %v198 = vsel %vm186, %v180, %v197
  %v199 = vsel %vm185, %v196, %v198
  %v200 = vshll.u32 %v160, 8
  %v201 = vmul.u32.u64.compose %v200, %v199
  %v202 = vextract.low.u32 %v201
  %v203 = vextract.high.u32 %v201
  %v204 = vmul.u32.u64.compose %v200, %v195
  %v205 = vextract.low.u32 %v204
  %v206 = vextract.high.u32 %v204
  %v207 = vmul.u32 %v200, %v191
  %v208 = vadd.s32 %v203, %v205
  %vm209 = vc.u32 %v203, %v205
  %v210 = vadd.s32 %v206, 1
  %v211 = vsel %vm209, %v210, %v206
  %v212 = vadd.s32 %v207, %v211
  %v213 = vadd.s32 %v212, 536870912
  %v214 = vshrl.u32 %v213, 30
  %v215 = vshll.u32 %v214, 30
  %v216 = vsub.s32 %v212, %v215
  %vm217 = vcmp.lt.s32.totalorder %v216, 0
  %v218 = vsub.s32 0, %v216
  %v219 = vsel %vm217, %v218, %v216
  %v220 = vclz %v219
  %v221 = vsub.s32 %v220, 2
  %vm222 = vcmp.gt.s32.totalorder 0, %v221
  %v223 = vsel %vm222, 0, %v221
  %v224 = vsub.s32 32, %v223
  %v225 = vshll.u32 %v216, %v223
  %v226 = vshrl.u32 %v208, %v224
  %v227 = vor.u32 %v225, %v226
  %v228 = vsub.s32 4294967266, %v223
  %v229 = vadd.s32 %v228, 127
  %v230 = vshll.u32 %v229, 23
  %v231 = vor.u32 4788187, %v230
  %v232 = vand.u32 2147483647, %v231
  %v234 = vcvt.s32.f32 %v227
  %v235 = vmul.f32 %v234, %v232
  %v236 = vxor.u32 %v235, 2147483648
  %v237 = vsel %vm154, %v236, %v235
  %v238 = vsub.s32 4, %v214
  %v239 = vsel %vm154, %v238, %v214
  %v240 = vsel %vm153, %v45, %v237
  %v241 = vsel %vm153, 0, %v239
  %v242 = vcosq.f32.pop %v240
  %v243 = vsinq.f32.pop %v240
  %vm244 = vweird.f32 %v45
  %v245 = vadd.s32 %v241, 3
  %v246 = vand.u32 %v245, 3
  %vm247 = vcmp.lt.s32.totalorder %v246, 2
  %vm248 = vcmp.eq.s32.totalorder %v246, 0
  %v249 = vxor.u32 %v243, 2147483648
  %v250 = vsel %vm248, %v242, %v249
  %vm251 = vcmp.eq.s32.totalorder %v246, 2
  %v252 = vxor.u32 %v242, 2147483648
  %v253 = vsel %vm251, %v252, %v243
  %v254 = vsel %vm247, %v250, %v253
  %v255 = vsel %vm244, nan, %v254
  %v256 = vmul.f32 %v38, 0.5
  %v257 = vmul.f32 %v45, 0.5
  %v258 = vand.u32 2147483647, %v256
  %vm259 = vcmp.le.f32.partialorder %v258, 0.7853982
  %vm260 = vcmp.lt.s32.totalorder %v256, 0
  %v261 = vand.u32 %v256, 2139095040
  %v262 = vshrl.u32 %v261, 23
  %v263 = vsub.s32 %v262, 127
  %v264 = vand.u32 2147483647, %v256
  %v265 = vand.u32 %v264, 8388607
  %v266 = vor.u32 %v265, 8388608
  %v267 = vsub.s32 0, %v266
  %v268 = vadd.s32 %v263, 1
  %vm269 = vcmp.gt.s32.totalorder %v268, 0
  %v270 = vsel %vm269, %v268, 0
  %v271 = vshrl.u32 %v270, 5
  %v272 = vand.u32 %v270, 31
  %v273 = vsub.s32 32, %v272
  %v274 = vshrl.u32 683565275, %v273
  %v275 = vshll.u32 683565275, %v272
  %v276 = vshrl.u32 2475754826, %v273
  %v277 = vor.u32 %v275, %v276
  %v278 = vshll.u32 2475754826, %v272
  %v279 = vshrl.u32 2131351028, %v273
  %v280 = vor.u32 %v278, %v279
  %v281 = vshll.u32 2131351028, %v272
  %v282 = vshrl.u32 2102212464, %v273
  %v283 = vor.u32 %v281, %v282
  %v284 = vshll.u32 2102212464, %v272
  %v285 = vshrl.u32 920167782, %v273
  %v286 = vor.u32 %v284, %v285
  %v287 = vshll.u32 920167782, %v272
  %v288 = vshrl.u32 1326507024, %v273
  %v289 = vor.u32 %v287, %v288
  %vm290 = vcmp.lt.s32.totalorder %v271, 1
  %vm291 = vcmp.lt.s32.totalorder %v271, 2
  %vm292 = vcmp.lt.s32.totalorder %v271, 3
  %vm293 = vcmp.lt.s32.totalorder %v271, 4
  %v294 = vsel %vm290, %v274, %v277
  %v295 = vsel %vm293, %v283, 2102212464
  %v296 = vsel %vm292, %v280, %v295
  %v297 = vsel %vm291, %v294, %v296
  %v298 = vsel %vm290, %v277, %v280
  %v299 = vsel %vm293, %v286, 920167782
  %v300 = vsel %vm292, %v283, %v299
  %v301 = vsel %vm291, %v298, %v300
  %v302 = vsel %vm290, %v280, %v283
  %v303 = vsel %vm293, %v289, 1326507024
  %v304 = vsel %vm292, %v286, %v303
  %v305 = vsel %vm291, %v302, %v304
  %v306 = vshll.u32 %v266, 8
  %v307 = vmul.u32.u64.compose %v306, %v305
  %v308 = vextract.low.u32 %v307
  %v309 = vextract.high.u32 %v307
  %v310 = vmul.u32.u64.compose %v306, %v301
  %v311 = vextract.low.u32 %v310
  %v312 = vextract.high.u32 %v310
  %v313 = vmul.u32 %v306, %v297
  %v314 = vadd.s32 %v309, %v311
  %vm315 = vc.u32 %v309, %v311
  %v316 = vadd.s32 %v312, 1
  %v317 = vsel %vm315, %v316, %v312
  %v318 = vadd.s32 %v313, %v317
  %v319 = vadd.s32 %v318, 536870912
  %v320 = vshrl.u32 %v319, 30
  %v321 = vshll.u32 %v320, 30
  %v322 = vsub.s32 %v318, %v321
  %vm323 = vcmp.lt.s32.totalorder %v322, 0
  %v324 = vsub.s32 0, %v322
  %v325 = vsel %vm323, %v324, %v322
  %v326 = vclz %v325
  %v327 = vsub.s32 %v326, 2
  %vm328 = vcmp.gt.s32.totalorder 0, %v327
  %v329 = vsel %vm328, 0, %v327
  %v330 = vsub.s32 32, %v329
  %v331 = vshll.u32 %v322, %v329
  %v332 = vshrl.u32 %v314, %v330
  %v333 = vor.u32 %v331, %v332
  %v334 = vsub.s32 4294967266, %v329
  %v335 = vadd.s32 %v334, 127
  %v336 = vshll.u32 %v335, 23
  %v337 = vor.u32 4788187, %v336
  %v338 = vand.u32 2147483647, %v337
  %v340 = vcvt.s32.f32 %v333
  %v341 = vmul.f32 %v340, %v338
  %v342 = vxor.u32 %v341, 2147483648
  %v343 = vsel %vm260, %v342, %v341
  %v344 = vsub.s32 4, %v320
  %v345 = vsel %vm260, %v344, %v320
  %v346 = vsel %vm259, %v256, %v343
  %v347 = vsel %vm259, 0, %v345
  %v348 = vcosq.f32.pop %v346
  %v349 = vsinq.f32.pop %v346
  %vm350 = vweird.f32 %v256
  %v351 = vadd.s32 %v347, 3
  %v352 = vand.u32 %v351, 3
  %vm353 = vcmp.lt.s32.totalorder %v352, 2
  %vm354 = vcmp.eq.s32.totalorder %v352, 0
  %v355 = vxor.u32 %v349, 2147483648
  %v356 = vsel %vm354, %v348, %v355
  %vm357 = vcmp.eq.s32.totalorder %v352, 2
  %v358 = vxor.u32 %v348, 2147483648
  %v359 = vsel %vm357, %v358, %v349
  %v360 = vsel %vm353, %v356, %v359
  %v361 = vsel %vm350, nan, %v360
  %v362 = vand.u32 2147483647, %v257
  %vm363 = vcmp.le.f32.partialorder %v362, 0.7853982
  %vm364 = vcmp.lt.s32.totalorder %v257, 0
  %v365 = vand.u32 %v257, 2139095040
  %v366 = vshrl.u32 %v365, 23
  %v367 = vsub.s32 %v366, 127
  %v368 = vand.u32 2147483647, %v257
  %v369 = vand.u32 %v368, 8388607
  %v370 = vor.u32 %v369, 8388608
  %v371 = vsub.s32 0, %v370
  %v372 = vadd.s32 %v367, 1
  %vm373 = vcmp.gt.s32.totalorder %v372, 0
  %v374 = vsel %vm373, %v372, 0
  %v375 = vshrl.u32 %v374, 5
  %v376 = vand.u32 %v374, 31
  %v377 = vsub.s32 32, %v376
  %v378 = vshrl.u32 683565275, %v377
  %v379 = vshll.u32 683565275, %v376
  %v380 = vshrl.u32 2475754826, %v377
  %v381 = vor.u32 %v379, %v380
  %v382 = vshll.u32 2475754826, %v376
  %v383 = vshrl.u32 2131351028, %v377
  %v384 = vor.u32 %v382, %v383
  %v385 = vshll.u32 2131351028, %v376
  %v386 = vshrl.u32 2102212464, %v377
  %v387 = vor.u32 %v385, %v386
  %v388 = vshll.u32 2102212464, %v376
  %v389 = vshrl.u32 920167782, %v377
  %v390 = vor.u32 %v388, %v389
  %v391 = vshll.u32 920167782, %v376
  %v392 = vshrl.u32 1326507024, %v377
  %v393 = vor.u32 %v391, %v392
  %vm394 = vcmp.lt.s32.totalorder %v375, 1
  %vm395 = vcmp.lt.s32.totalorder %v375, 2
  %vm396 = vcmp.lt.s32.totalorder %v375, 3
  %vm397 = vcmp.lt.s32.totalorder %v375, 4
  %v398 = vsel %vm394, %v378, %v381
  %v399 = vsel %vm397, %v387, 2102212464
  %v400 = vsel %vm396, %v384, %v399
  %v401 = vsel %vm395, %v398, %v400
  %v402 = vsel %vm394, %v381, %v384
  %v403 = vsel %vm397, %v390, 920167782
  %v404 = vsel %vm396, %v387, %v403
  %v405 = vsel %vm395, %v402, %v404
  %v406 = vsel %vm394, %v384, %v387
  %v407 = vsel %vm397, %v393, 1326507024
  %v408 = vsel %vm396, %v390, %v407
  %v409 = vsel %vm395, %v406, %v408
  %v410 = vshll.u32 %v370, 8
  %v411 = vmul.u32.u64.compose %v410, %v409
  %v412 = vextract.low.u32 %v411
  %v413 = vextract.high.u32 %v411
  %v414 = vmul.u32.u64.compose %v410, %v405
  %v415 = vextract.low.u32 %v414
  %v416 = vextract.high.u32 %v414
  %v417 = vmul.u32 %v410, %v401
  %v418 = vadd.s32 %v413, %v415
  %vm419 = vc.u32 %v413, %v415
  %v420 = vadd.s32 %v416, 1
  %v421 = vsel %vm419, %v420, %v416
  %v422 = vadd.s32 %v417, %v421
  %v423 = vadd.s32 %v422, 536870912
  %v424 = vshrl.u32 %v423, 30
  %v425 = vshll.u32 %v424, 30
  %v426 = vsub.s32 %v422, %v425
  %vm427 = vcmp.lt.s32.totalorder %v426, 0
  %v428 = vsub.s32 0, %v426
  %v429 = vsel %vm427, %v428, %v426
  %v430 = vclz %v429
  %v431 = vsub.s32 %v430, 2
  %vm432 = vcmp.gt.s32.totalorder 0, %v431
  %v433 = vsel %vm432, 0, %v431
  %v434 = vsub.s32 32, %v433
  %v435 = vshll.u32 %v426, %v433
  %v436 = vshrl.u32 %v418, %v434
  %v437 = vor.u32 %v435, %v436
  %v438 = vsub.s32 4294967266, %v433
  %v439 = vadd.s32 %v438, 127
  %v440 = vshll.u32 %v439, 23
  %v441 = vor.u32 4788187, %v440
  %v442 = vand.u32 2147483647, %v441
  %v444 = vcvt.s32.f32 %v437
  %v445 = vmul.f32 %v444, %v442
  %v446 = vxor.u32 %v445, 2147483648
  %v447 = vsel %vm364, %v446, %v445
  %v448 = vsub.s32 4, %v424
  %v449 = vsel %vm364, %v448, %v424
  %v450 = vsel %vm363, %v257, %v447
  %v451 = vsel %vm363, 0, %v449
  %v452 = vcosq.f32.pop %v450
  %v453 = vsinq.f32.pop %v450
  %vm454 = vweird.f32 %v257
  %v455 = vadd.s32 %v451, 3
  %v456 = vand.u32 %v455, 3
  %vm457 = vcmp.lt.s32.totalorder %v456, 2
  %vm458 = vcmp.eq.s32.totalorder %v456, 0
  %v459 = vxor.u32 %v453, 2147483648
  %v460 = vsel %vm458, %v452, %v459
  %vm461 = vcmp.eq.s32.totalorder %v456, 2
  %v462 = vxor.u32 %v452, 2147483648
  %v463 = vsel %vm461, %v462, %v453
  %v464 = vsel %vm457, %v460, %v463
  %v465 = vsel %vm454, nan, %v464
  %v466 = vmul.f32 %v26, 0.16666667
  %v467 = vmul.f32 %v27, 0.16666667
  %v468 = vsub.f32 1.0, %v466
  %v469 = vsub.f32 1.0, %v467
  %v470 = vmul.f32 %v151, %v38
  %v471 = vmul.f32 %v255, %v45
  %v472 = vmul.f32 %v470, %v46
  %v473 = vmul.f32 %v471, %v47
  %v474 = vsel %vm28, %v468, %v472
  %v475 = vsel %vm29, %v469, %v473
  %v476 = vmul.f32 %v26, 0.041666668
  %v477 = vmul.f32 %v27, 0.041666668
  %v478 = vsub.f32 0.5, %v476
  %v479 = vsub.f32 0.5, %v477
  %v480 = vmul.f32 %v361, 2.0
  %v481 = vmul.f32 %v465, 2.0
  %v482 = vmul.f32 %v480, %v361
  %v483 = vmul.f32 %v481, %v465
  %v484 = vmul.f32 %v482, %v46
  %v485 = vmul.f32 %v483, %v47
  %v486 = vsel %vm28, %v478, %v484
  %v487 = vsel %vm29, %v479, %v485
  %s488 = sadd.s32 0, 48
  %s489 = scalar_lea.vmem %s0, %s488
  %v490 = vld [vmem:[%s489] sm:$0xff]
  %v491 = vld [vmem:[%s489 + $0x8] sm:$0xff]
  %s492 = sadd.s32 0, 96
  %s493 = scalar_lea.vmem %s0, %s492
  %v494 = vld [vmem:[%s493] sm:$0xff]
  %v495 = vld [vmem:[%s493 + $0x8] sm:$0xff]
  %s496 = sadd.s32 0, 144
  %s497 = scalar_lea.vmem %s0, %s496
  %v498 = vld [vmem:[%s497] sm:$0xff]
  %v499 = vld [vmem:[%s497 + $0x8] sm:$0xff]
  %v500 = vmul.f32 %v12, %v498
  %v501 = vmul.f32 %v13, %v499
  %v502 = vmul.f32 %v16, %v494
  %v503 = vmul.f32 %v17, %v495
  %v504 = vsub.f32 %v500, %v502
  %v505 = vsub.f32 %v501, %v503
  %v506 = vmul.f32 %v16, %v490
  %v507 = vmul.f32 %v17, %v491
  %v508 = vmul.f32 %v8, %v498
  %v509 = vmul.f32 %v9, %v499
  %v510 = vsub.f32 %v506, %v508
  %v511 = vsub.f32 %v507, %v509
  %v512 = vmul.f32 %v8, %v494
  %v513 = vmul.f32 %v9, %v495
  %v514 = vmul.f32 %v12, %v490
  %v515 = vmul.f32 %v13, %v491
  %v516 = vsub.f32 %v512, %v514
  %v517 = vsub.f32 %v513, %v515
  %v518 = vmul.f32 %v12, %v516
  %v519 = vmul.f32 %v13, %v517
  %v520 = vmul.f32 %v16, %v510
  %v521 = vmul.f32 %v17, %v511
  %v522 = vsub.f32 %v518, %v520
  %v523 = vsub.f32 %v519, %v521
  %v524 = vmul.f32 %v16, %v504
  %v525 = vmul.f32 %v17, %v505
  %v526 = vmul.f32 %v8, %v516
  %v527 = vmul.f32 %v9, %v517
  %v528 = vsub.f32 %v524, %v526
  %v529 = vsub.f32 %v525, %v527
  %v530 = vmul.f32 %v8, %v510
  %v531 = vmul.f32 %v9, %v511
  %v532 = vmul.f32 %v12, %v504
  %v533 = vmul.f32 %v13, %v505
  %v534 = vsub.f32 %v530, %v532
  %v535 = vsub.f32 %v531, %v533
  %v536 = vmul.f32 %v474, %v504
  %v537 = vmul.f32 %v475, %v505
  %v538 = vadd.f32 %v490, %v536
  %v539 = vadd.f32 %v491, %v537
  %v540 = vmul.f32 %v486, %v522
  %v541 = vmul.f32 %v487, %v523
  %v542 = vadd.f32 %v538, %v540
  %v543 = vadd.f32 %v539, %v541
  %544 = vst [vmem:[%s1] sm:$0xff] %v542
  %545 = vst [vmem:[%s1 + $0x8] sm:$0xff] %v543
  %v546 = vmul.f32 %v474, %v510
  %v547 = vmul.f32 %v475, %v511
  %v548 = vadd.f32 %v494, %v546
  %v549 = vadd.f32 %v495, %v547
  %v550 = vmul.f32 %v486, %v528
  %v551 = vmul.f32 %v487, %v529
  %v552 = vadd.f32 %v548, %v550
  %v553 = vadd.f32 %v549, %v551
  %s554 = scalar_lea.vmem %s1, %s488
  %555 = vst [vmem:[%s554] sm:$0xff] %v552
  %556 = vst [vmem:[%s554 + $0x8] sm:$0xff] %v553
  %v557 = vmul.f32 %v474, %v516
  %v558 = vmul.f32 %v475, %v517
  %v559 = vadd.f32 %v498, %v557
  %v560 = vadd.f32 %v499, %v558
  %v561 = vmul.f32 %v486, %v534
  %v562 = vmul.f32 %v487, %v535
  %v563 = vadd.f32 %v559, %v561
  %v564 = vadd.f32 %v560, %v562
  %s565 = scalar_lea.vmem %s1, %s492
  %566 = vst [vmem:[%s565] sm:$0xff] %v563
  %567 = vst [vmem:[%s565 + $0x8] sm:$0xff] %v564
  %s568 = sadd.s32 0, 64
  %s569 = scalar_lea.vmem %s0, %s568
  %v570 = vld [vmem:[%s569] sm:$0xff]
  %v571 = vld [vmem:[%s569 + $0x8] sm:$0xff]
  %s572 = sadd.s32 0, 112
  %s573 = scalar_lea.vmem %s0, %s572
  %v574 = vld [vmem:[%s573] sm:$0xff]
  %v575 = vld [vmem:[%s573 + $0x8] sm:$0xff]
  %s576 = sadd.s32 0, 160
  %s577 = scalar_lea.vmem %s0, %s576
  %v578 = vld [vmem:[%s577] sm:$0xff]
  %v579 = vld [vmem:[%s577 + $0x8] sm:$0xff]
  %v580 = vmul.f32 %v12, %v578
  %v581 = vmul.f32 %v13, %v579
  %v582 = vmul.f32 %v16, %v574
  %v583 = vmul.f32 %v17, %v575
  %v584 = vsub.f32 %v580, %v582
  %v585 = vsub.f32 %v581, %v583
  %v586 = vmul.f32 %v16, %v570
  %v587 = vmul.f32 %v17, %v571
  %v588 = vmul.f32 %v8, %v578
  %v589 = vmul.f32 %v9, %v579
  %v590 = vsub.f32 %v586, %v588
  %v591 = vsub.f32 %v587, %v589
  %v592 = vmul.f32 %v8, %v574
  %v593 = vmul.f32 %v9, %v575
  %v594 = vmul.f32 %v12, %v570
  %v595 = vmul.f32 %v13, %v571
  %v596 = vsub.f32 %v592, %v594
  %v597 = vsub.f32 %v593, %v595
  %v598 = vmul.f32 %v12, %v596
  %v599 = vmul.f32 %v13, %v597
  %v600 = vmul.f32 %v16, %v590
  %v601 = vmul.f32 %v17, %v591
  %v602 = vsub.f32 %v598, %v600
  %v603 = vsub.f32 %v599, %v601
  %v604 = vmul.f32 %v16, %v584
  %v605 = vmul.f32 %v17, %v585
  %v606 = vmul.f32 %v8, %v596
  %v607 = vmul.f32 %v9, %v597
  %v608 = vsub.f32 %v604, %v606
  %v609 = vsub.f32 %v605, %v607
  %v610 = vmul.f32 %v8, %v590
  %v611 = vmul.f32 %v9, %v591
  %v612 = vmul.f32 %v12, %v584
  %v613 = vmul.f32 %v13, %v585
  %v614 = vsub.f32 %v610, %v612
  %v615 = vsub.f32 %v611, %v613
  %v616 = vmul.f32 %v474, %v584
  %v617 = vmul.f32 %v475, %v585
  %v618 = vadd.f32 %v570, %v616
  %v619 = vadd.f32 %v571, %v617
  %v620 = vmul.f32 %v486, %v602
  %v621 = vmul.f32 %v487, %v603
  %v622 = vadd.f32 %v618, %v620
  %v623 = vadd.f32 %v619, %v621
  %s624 = scalar_lea.vmem %s1, %s10
  %625 = vst [vmem:[%s624] sm:$0xff] %v622
  %626 = vst [vmem:[%s624 + $0x8] sm:$0xff] %v623
  %v627 = vmul.f32 %v474, %v590
  %v628 = vmul.f32 %v475, %v591
  %v629 = vadd.f32 %v574, %v627
  %v630 = vadd.f32 %v575, %v628
  %v631 = vmul.f32 %v486, %v608
  %v632 = vmul.f32 %v487, %v609
  %v633 = vadd.f32 %v629, %v631
  %v634 = vadd.f32 %v630, %v632
  %s635 = scalar_lea.vmem %s1, %s568
  %636 = vst [vmem:[%s635] sm:$0xff] %v633
  %637 = vst [vmem:[%s635 + $0x8] sm:$0xff] %v634
  %v638 = vmul.f32 %v474, %v596
  %v639 = vmul.f32 %v475, %v597
  %v640 = vadd.f32 %v578, %v638
  %v641 = vadd.f32 %v579, %v639
  %v642 = vmul.f32 %v486, %v614
  %v643 = vmul.f32 %v487, %v615
  %v644 = vadd.f32 %v640, %v642
  %v645 = vadd.f32 %v641, %v643
  %s646 = scalar_lea.vmem %s1, %s572
  %647 = vst [vmem:[%s646] sm:$0xff] %v644
  %648 = vst [vmem:[%s646 + $0x8] sm:$0xff] %v645
  %s649 = sadd.s32 0, 80
  %s650 = scalar_lea.vmem %s0, %s649
  %v651 = vld [vmem:[%s650] sm:$0xff]
  %v652 = vld [vmem:[%s650 + $0x8] sm:$0xff]
  %s653 = sadd.s32 0, 128
  %s654 = scalar_lea.vmem %s0, %s653
  %v655 = vld [vmem:[%s654] sm:$0xff]
  %v656 = vld [vmem:[%s654 + $0x8] sm:$0xff]
  %s657 = sadd.s32 0, 176
  %s658 = scalar_lea.vmem %s0, %s657
  %v659 = vld [vmem:[%s658] sm:$0xff]
  %v660 = vld [vmem:[%s658 + $0x8] sm:$0xff]
  %v661 = vmul.f32 %v12, %v659
  %v662 = vmul.f32 %v13, %v660
  %v663 = vmul.f32 %v16, %v655
  %v664 = vmul.f32 %v17, %v656
  %v665 = vsub.f32 %v661, %v663
  %v666 = vsub.f32 %v662, %v664
  %v667 = vmul.f32 %v16, %v651
  %v668 = vmul.f32 %v17, %v652
  %v669 = vmul.f32 %v8, %v659
  %v670 = vmul.f32 %v9, %v660
  %v671 = vsub.f32 %v667, %v669
  %v672 = vsub.f32 %v668, %v670
  %v673 = vmul.f32 %v8, %v655
  %v674 = vmul.f32 %v9, %v656
  %v675 = vmul.f32 %v12, %v651
  %v676 = vmul.f32 %v13, %v652
  %v677 = vsub.f32 %v673, %v675
  %v678 = vsub.f32 %v674, %v676
  %v679 = vmul.f32 %v12, %v677
  %v680 = vmul.f32 %v13, %v678
  %v681 = vmul.f32 %v16, %v671
  %v682 = vmul.f32 %v17, %v672
  %v683 = vsub.f32 %v679, %v681
  %v684 = vsub.f32 %v680, %v682
  %v685 = vmul.f32 %v16, %v665
  %v686 = vmul.f32 %v17, %v666
  %v687 = vmul.f32 %v8, %v677
  %v688 = vmul.f32 %v9, %v678
  %v689 = vsub.f32 %v685, %v687
  %v690 = vsub.f32 %v686, %v688
  %v691 = vmul.f32 %v8, %v671
  %v692 = vmul.f32 %v9, %v672
  %v693 = vmul.f32 %v12, %v665
  %v694 = vmul.f32 %v13, %v666
  %v695 = vsub.f32 %v691, %v693
  %v696 = vsub.f32 %v692, %v694
  %v697 = vmul.f32 %v474, %v665
  %v698 = vmul.f32 %v475, %v666
  %v699 = vadd.f32 %v651, %v697
  %v700 = vadd.f32 %v652, %v698
  %v701 = vmul.f32 %v486, %v683
  %v702 = vmul.f32 %v487, %v684
  %v703 = vadd.f32 %v699, %v701
  %v704 = vadd.f32 %v700, %v702
  %s705 = scalar_lea.vmem %s1, %s14
  %706 = vst [vmem:[%s705] sm:$0xff] %v703
  %707 = vst [vmem:[%s705 + $0x8] sm:$0xff] %v704
  %v708 = vmul.f32 %v474, %v671
  %v709 = vmul.f32 %v475, %v672
  %v710 = vadd.f32 %v655, %v708
  %v711 = vadd.f32 %v656, %v709
  %v712 = vmul.f32 %v486, %v689
  %v713 = vmul.f32 %v487, %v690
  %v714 = vadd.f32 %v710, %v712
  %v715 = vadd.f32 %v711, %v713
  %s716 = scalar_lea.vmem %s1, %s649
  %717 = vst [vmem:[%s716] sm:$0xff] %v714
  %718 = vst [vmem:[%s716 + $0x8] sm:$0xff] %v715
  %v719 = vmul.f32 %v474, %v677
  %v720 = vmul.f32 %v475, %v678
  %v721 = vadd.f32 %v659, %v719
  %v722 = vadd.f32 %v660, %v720
  %v723 = vmul.f32 %v486, %v695
  %v724 = vmul.f32 %v487, %v696
  %v725 = vadd.f32 %v721, %v723
  %v726 = vadd.f32 %v722, %v724
  %s727 = scalar_lea.vmem %s1, %s653
  %728 = vst [vmem:[%s727] sm:$0xff] %v725
  %729 = vst [vmem:[%s727 + $0x8] sm:$0xff] %v726
  // Predicated region
  $region6: #{_lambda_.1} parent=0 // pred_check
    _
  $region7: #{_lambda_.1} parent=0 // pred_check_branch
    %731 = sbr.rel (0) target = $region9
  $region8: #{_lambda_.1} parent=0 // pred_region
    _
  $region9: #{_lambda_.1} parent=0 // pred_fallthru
    _
  // Predicated region
  $region10: #{_lambda_.1} parent=0 // pred_check
    _
  $region11: #{_lambda_.1} parent=0 // pred_check_branch
    %733 = sbr.rel (0) target = $region13
  $region12: #{_lambda_.1} parent=0 // pred_region
    _
  $region13: #{_lambda_.1} parent=0 // pred_fallthru
    _

</llo_original>
